<compile_context>
chip_gen: v7x
topology: tpu7x:2x2x1
jax: 0.10.0
libtpu: 0.0.40
codegen_flags: <defaults>
</compile_context>

<pallas_src>
import functools

import jax
import jax.numpy as jnp
from jax.experimental import pallas as pl
from jax.experimental.pallas import tpu as pltpu


def _round_up(a: int, b: int) -> int:
    return (a + b - 1) // b * b


def _balanced_tile(dim: int, cap: int, align: int) -> int:
    """Tile size <= cap, multiple of `align`, with balanced edge tiles."""
    n_tiles = -(-dim // cap)                 # ceil(dim / cap)
    return _round_up(-(-dim // n_tiles), align)


def linear_kernel(x_ref, w_ref, b_ref, o_ref, acc_ref):
    """One (tm, tn) output tile, accumulated over the (innermost) K grid axis.

    x_ref: [tm, tk] bf16    w_ref: [tk, tn] bf16 (weight already [K, N])
    b_ref: [1, tn]  f32     o_ref: [tm, tn] out dtype
    acc_ref: [tm, tn] f32 scratch (resident across the K axis).
    """
    k = pl.program_id(2)

    @pl.when(k == 0)
    def _init():
        # Fold the bias into the accumulator init (broadcast over rows).
        acc_ref[...] = jnp.zeros(acc_ref.shape, jnp.float32) + b_ref[...]

    acc_ref[...] += jnp.dot(
        x_ref[...], w_ref[...], preferred_element_type=jnp.float32
    )

    @pl.when(k == pl.num_programs(2) - 1)
    def _store():
        o_ref[...] = acc_ref[...].astype(o_ref.dtype)


def prepare_linear_params(weight, bias, *, tn_max=512, tk_max=1024,
                          compute_dtype=jnp.bfloat16):
    """One-time (per parameter set) prep: cast, pad and pre-transpose W.

    weight: [out_dim, in_dim] (PyTorch layout), bias: [out_dim].
    Returns (w_kn [K_pad, N_pad] compute_dtype, bias2d [1, N_pad] f32, tn, tk).
    """
    N, K = weight.shape
    tn = _balanced_tile(N, tn_max, 128)
    tk = _balanced_tile(K, tk_max, 128)
    N_pad = _round_up(N, tn)
    K_pad = _round_up(K, tk)

    w_padded = jnp.pad(weight.astype(compute_dtype),
                       ((0, N_pad - N), (0, K_pad - K)))
    w_kn = jnp.asarray(w_padded.T)            # materialize [K_pad, N_pad] once
    bias2d = jnp.pad(bias.astype(jnp.float32), (0, N_pad - N)).reshape(1, N_pad)
    return w_kn, bias2d, tn, tk


@functools.partial(jax.jit, static_argnames=("n_out", "tm_max", "tn", "tk"))
def _linear_forward(x, w_kn, bias2d, *, n_out, tm_max, tn, tk):
    """y[:B, :n_out] = x @ W.T + b, with W supplied pre-transposed/padded."""
    B, K = x.shape
    K_pad, N_pad = w_kn.shape
    compute_dtype = w_kn.dtype
    out_dtype = x.dtype

    # --- M tile (bf16 packs 16 sublanes per vreg) ---------------------------
    tm = _balanced_tile(B, tm_max, 16)
    M_pad = _round_up(B, tm)

    # v7x megacore: if the parallel (M, N) grid collapses to one tile, split N
    # so both TensorCores get work (W is still read once; only cheap x
    # re-streaming is added).  No-op on v5e/v6e.
    if (M_pad // tm) * (N_pad // tn) == 1 and N_pad % 256 == 0:
        tn = N_pad // 2

    # --- pad x (after the bf16 cast, so the pad traffic is halved too) ------
    xc = x.astype(compute_dtype)
    if (M_pad, K_pad) != (B, K):
        xc = jnp.pad(xc, ((0, M_pad - B), (0, K_pad - K)))

    grid = (M_pad // tm, N_pad // tn, K_pad // tk)

    in_isz = compute_dtype.itemsize
    out_isz = out_dtype.itemsize
    cost = pl.CostEstimate(
        flops=2 * M_pad * N_pad * K_pad,
        transcendentals=0,
        bytes_accessed=(
            M_pad * K_pad * grid[1] * in_isz        # x re-read per N tile
            + K_pad * N_pad * grid[0] * in_isz      # W re-read per M tile
            + M_pad * N_pad * out_isz               # output written once
            + N_pad * 4                             # bias
        ),
    )

    # Explicit VMEM budget: double-buffered input/output blocks + f32 acc.
    # Capped at 64 MiB so the same setting is valid on v7x (64 MiB physical)
    # and raises the 16/32 MiB scoped defaults on v5e/v6e when needed.
    vmem_bytes = (
        2 * (tm * tk + tk * tn) * in_isz
        + 2 * tm * tn * out_isz
        + tm * tn * 4
        + 2 * tn * 4
    )
    vmem_limit = int(min(max(2 * vmem_bytes, 32 * 1024 * 1024),
                         64 * 1024 * 1024))

    out_padded = pl.pallas_call(
        linear_kernel,
        out_shape=jax.ShapeDtypeStruct((M_pad, N_pad), out_dtype),
        grid_spec=pltpu.PrefetchScalarGridSpec(
            num_scalar_prefetch=0,
            grid=grid,
            in_specs=[
                pl.BlockSpec((tm, tk), lambda i, j, k: (i, k)),   # x tile
                pl.BlockSpec((tk, tn), lambda i, j, k: (k, j)),   # W[K,N] tile
                pl.BlockSpec((1, tn), lambda i, j, k: (0, j)),    # bias tile
            ],
            out_specs=pl.BlockSpec((tm, tn), lambda i, j, k: (i, j)),
            scratch_shapes=[pltpu.VMEM((tm, tn), jnp.float32)],
        ),
        compiler_params=pltpu.CompilerParams(
            # K (axis 2) must stay the innermost, sequential axis for the
            # accumulator to be correct.
            dimension_semantics=("parallel", "parallel", "arbitrary"),
            vmem_limit_bytes=vmem_limit,
        ),
        cost_estimate=cost,
    )(xc, w_kn, bias2d)

    return out_padded[:B, :n_out]


def lr_forward(x, weight, bias, *, tm_max=512, tn_max=512, tk_max=1024,
               compute_dtype=jnp.bfloat16):
    """nn.Linear forward (PyTorch layout): y = x @ weight.T + bias.

    Convenience one-shot wrapper.  For repeated calls with the same weights,
    call prepare_linear_params once and reuse its outputs with
    _linear_forward to avoid re-padding/re-transposing the static weight.
    """
    N, K = weight.shape
    lead = x.shape[:-1]
    x2d = x.reshape(-1, K)
    w_kn, bias2d, tn, tk = prepare_linear_params(
        weight, bias, tn_max=tn_max, tk_max=tk_max, compute_dtype=compute_dtype)
    out = _linear_forward(x2d, w_kn, bias2d, n_out=N,
                          tm_max=tm_max, tn=tn, tk=tk)
    return out.reshape(*lead, N)


if __name__ == "__main__":
    key = jax.random.PRNGKey(0)
    k_x, k_w, k_b, k_x2, k_w2, k_b2 = jax.random.split(key, 6)

    def bf16_ref(x, w, b):
        xq = x.astype(jnp.bfloat16).astype(jnp.float32)
        wq = w.astype(jnp.bfloat16).astype(jnp.float32)
        return jnp.dot(xq, wq.T, precision=jax.lax.Precision.HIGHEST) + b

    # ---- check 1: the module's demo shapes (single-tile path) --------------
    batch, input_dim, output_dim = 8, 32, 16
    bound = 1.0 / (input_dim ** 0.5)
    weight = jax.random.uniform(k_w, (output_dim, input_dim),
                                minval=-bound, maxval=bound, dtype=jnp.float32)
    bias = jax.random.uniform(k_b, (output_dim,),
                              minval=-bound, maxval=bound, dtype=jnp.float32)
    x = jax.random.normal(k_x, (batch, input_dim), dtype=jnp.float32)

    out = jax.block_until_ready(lr_forward(x, weight, bias))
    ref = bf16_ref(x, weight, bias)
    assert out.shape == (batch, output_dim)
    assert jnp.allclose(out, ref, atol=2e-3, rtol=2e-3), "demo-shape mismatch"

    # ---- check 2: larger shapes exercising the tiled grid + K padding ------
    B2, K2, N2 = 300, 1000, 512        # exercises balanced edge tiles + N split
    bound2 = 1.0 / (K2 ** 0.5)
    w2 = jax.random.uniform(k_w2, (N2, K2), minval=-bound2, maxval=bound2,
                            dtype=jnp.float32)
    b2 = jax.random.uniform(k_b2, (N2,), minval=-bound2, maxval=bound2,
                            dtype=jnp.float32)
    x2 = jax.random.normal(k_x2, (B2, K2), dtype=jnp.float32)

    out2 = jax.block_until_ready(lr_forward(x2, w2, b2))
    ref2 = bf16_ref(x2, w2, b2)
    assert out2.shape == (B2, N2)
    assert jnp.allclose(out2, ref2, atol=5e-3, rtol=5e-3), "tiled-path mismatch"

    print("KERNEL_OK")
</pallas_src>

<mosaic_0001>
module attributes {stable_mosaic.version = 11 : i64} {
  func.func @linear_kernel(%arg0: i32, %arg1: i32, %arg2: i32, %arg3: memref<16x128xbf16, #tpu.memory_space<vmem>>, %arg4: memref<128x128xbf16, #tpu.memory_space<vmem>>, %arg5: memref<1x128xf32, #tpu.memory_space<vmem>>, %arg6: memref<16x128xf32, #tpu.memory_space<vmem>>, %arg7: memref<16x128xf32, #tpu.memory_space<vmem>>) attributes {dimension_semantics = [#tpu.dimension_semantics<parallel>, #tpu.dimension_semantics<parallel>, #tpu.dimension_semantics<arbitrary>], iteration_bounds = array<i64: 1, 1, 1>, scalar_prefetch = 0 : i64, scratch_operands = 1 : i64, tpu.core_type = #tpu.core_type<tc>, window_params = [{transform_indices = @transform_0, window_bounds = array<i64: 16, 128>}, {transform_indices = @transform_1, window_bounds = array<i64: 128, 128>}, {transform_indices = @transform_2, window_bounds = array<i64: 1, 128>}, {transform_indices = @transform_3, window_bounds = array<i64: 16, 128>}]} {
    %c0_i32 = arith.constant 0 : i32
    %0 = arith.cmpi eq, %arg2, %c0_i32 : i32
    %1 = arith.extui %0 : i1 to i32
    %c0_i32_0 = arith.constant 0 : i32
    %2 = arith.cmpi ne, %1, %c0_i32_0 : i32
    scf.if %2 {
      %cst_10 = arith.constant 0.000000e+00 : f32
      %12 = vector.broadcast %cst_10 : f32 to vector<16x128xf32>
      %c0_11 = arith.constant 0 : index
      %c0_12 = arith.constant 0 : index
      %13 = vector.load %arg5[%c0_11, %c0_12] : memref<1x128xf32, #tpu.memory_space<vmem>>, vector<1x128xf32>
      %14 = vector.broadcast %13 : vector<1x128xf32> to vector<16x128xf32>
      %15 = arith.addf %12, %14 : vector<16x128xf32>
      %c0_13 = arith.constant 0 : index
      %c0_14 = arith.constant 0 : index
      %16 = vector.load %arg7[%c0_13, %c0_14] : memref<16x128xf32, #tpu.memory_space<vmem>>, vector<16x128xf32>
      tpu.vector_store %arg7[%c0_13, %c0_14], %15 {strides = array<i32>} : memref<16x128xf32, #tpu.memory_space<vmem>>, vector<16x128xf32>,
    } else {
    }
    %c0 = arith.constant 0 : index
    %c0_1 = arith.constant 0 : index
    %3 = vector.load %arg7[%c0, %c0_1] : memref<16x128xf32, #tpu.memory_space<vmem>>, vector<16x128xf32>
    %c0_2 = arith.constant 0 : index
    %c0_3 = arith.constant 0 : index
    %4 = vector.load %arg3[%c0_2, %c0_3] : memref<16x128xbf16, #tpu.memory_space<vmem>>, vector<16x128xbf16>
    %c0_4 = arith.constant 0 : index
    %c0_5 = arith.constant 0 : index
    %5 = vector.load %arg4[%c0_4, %c0_5] : memref<128x128xbf16, #tpu.memory_space<vmem>>, vector<128x128xbf16>
    %cst = arith.constant dense<0.000000e+00> : vector<16x128xf32>
    %6 = tpu.matmul %4, %5, %cst {dimension_numbers = #tpu.dot_dimension_numbers<[1], [0], [0], [1], [0, 0, 1, 1], [], []>} : vector<16x128xbf16>, vector<128x128xbf16>, vector<16x128xf32> -> vector<16x128xf32>
    %7 = arith.addf %3, %6 : vector<16x128xf32>
    %c0_6 = arith.constant 0 : index
    %c0_7 = arith.constant 0 : index
    %8 = vector.load %arg7[%c0_6, %c0_7] : memref<16x128xf32, #tpu.memory_space<vmem>>, vector<16x128xf32>
    tpu.vector_store %arg7[%c0_6, %c0_7], %7 {strides = array<i32>} : memref<16x128xf32, #tpu.memory_space<vmem>>, vector<16x128xf32>,
    %c0_i32_8 = arith.constant 0 : i32
    %9 = arith.cmpi eq, %arg2, %c0_i32_8 : i32
    %10 = arith.extui %9 : i1 to i32
    %c0_i32_9 = arith.constant 0 : i32
    %11 = arith.cmpi ne, %10, %c0_i32_9 : i32
    scf.if %11 {
      %c0_10 = arith.constant 0 : index
      %c0_11 = arith.constant 0 : index
      %12 = vector.load %arg7[%c0_10, %c0_11] : memref<16x128xf32, #tpu.memory_space<vmem>>, vector<16x128xf32>
      %c0_12 = arith.constant 0 : index
      %c0_13 = arith.constant 0 : index
      %13 = vector.load %arg6[%c0_12, %c0_13] : memref<16x128xf32, #tpu.memory_space<vmem>>, vector<16x128xf32>
      tpu.vector_store %arg6[%c0_12, %c0_13], %12 {strides = array<i32>} : memref<16x128xf32, #tpu.memory_space<vmem>>, vector<16x128xf32>,
    } else {
    }
    return
  }
  func.func @transform_0(%arg0: i32, %arg1: i32, %arg2: i32) -> (i32, i32) {
    %c0_i32 = arith.constant 0 : i32
    return %arg0, %arg2 : i32, i32
  }
  func.func @transform_1(%arg0: i32, %arg1: i32, %arg2: i32) -> (i32, i32) {
    %c0_i32 = arith.constant 0 : i32
    return %arg2, %arg1 : i32, i32
  }
  func.func @transform_2(%arg0: i32, %arg1: i32, %arg2: i32) -> (i32, i32) {
    %c0_i32 = arith.constant 0 : i32
    %c0_i32_0 = arith.constant 0 : i32
    return %c0_i32, %arg1 : i32, i32
  }
  func.func @transform_3(%arg0: i32, %arg1: i32, %arg2: i32) -> (i32, i32) {
    %c0_i32 = arith.constant 0 : i32
    return %arg0, %arg1 : i32, i32
  }
}

</mosaic_0001>

<llo_original>
// kernel: _linear_forward.1
$region0: #{_linear_forward.1}
  #allocation0 [shape = 'u32[]', space=smem, size = 0x4, offset = 0x4, fixed_abs, tag = 'smem constant byte address 0x4 - core index']
  #allocation1 [shape = 'u32[144,128]{1,0:T(1,128)}', space=vmem, size = 0x12000, scoped, tag = 'internal scratch']
  #allocation2 [shape = 'f32[16,128]{1,0:T(8,128)}', space=vmem, size = 0x2000, scoped, tag = 'scratch operand']
  %s0 = inlined_call_operand.vmem [shape: bf16[16,128], index: 0, kind: input, shape index: {}]
  %s1 = inlined_call_operand.hbm [shape: bf16[128,128], index: 1, kind: input, shape index: {}]
  %s2 = inlined_call_operand.vmem [shape: f32[1,128], index: 2, kind: input, shape index: {}]
  %s3 = inlined_call_operand.vmem [shape: f32[16,128], index: 3, kind: output, shape index: {}]
  %s4 = sld [smem:[#allocation0]]
  $region34: #{_linear_forward.1} parent=0
    _
  %s6 = ssub.s32 1, %s4
  %s7 = scalar_select 0, %s6, %s4
  $region1: #{_linear_forward.1} parent=0
    #allocation3 [shape = 'u8[32768]{0}', space=vmem, size = 0x8000, scoped, tag = 'input window, operand 1, single buffered']
    #allocation4 [shape = 's32[1]{0}', space=sflag, size = 0x4, scoped, tag = 'scoped memory for _linear_forward.1']
    %8 = vsyncpa [#allocation4], 0
    // Predicated region
    $region2: #{_linear_forward.1} parent=1 // pred_check
      _
    $region3: #{_linear_forward.1} parent=1 // pred_check_branch
      %10 = sbr.rel (0) target = $region5
    $region4: #{_linear_forward.1} parent=1 // pred_region
      _
    $region5: #{_linear_forward.1} parent=1 // pred_fallthru
      _
    // Predicated region
    $region6: #{_linear_forward.1} parent=1 // pred_check
      _
    $region7: #{_linear_forward.1} parent=1 // pred_check_branch
      %12 = sbr.rel (0) target = $region9
    $region8: #{_linear_forward.1} parent=1 // pred_region
      %s14 = ssub.s32 1024, 1024
      %15 = vsyncadd [#allocation4], %s14
      %s16 = sshll.u32 [#allocation3], 4
      %s17 = int_to_ptr.vmem [resolvable:$true] %s16
      %22 = dma.hbm_to_vmem [thread:$0]  %s1, 1024, %s17, [#allocation4], 64, 64, 4
    $region9: #{_linear_forward.1} parent=1 // pred_fallthru
      _
    // Predicated region
    $region10: #{_linear_forward.1} parent=1 // pred_check
      _
    $region11: #{_linear_forward.1} parent=1 // pred_check_branch
      %24 = sbr.rel (0) target = $region13
    $region12: #{_linear_forward.1} parent=1 // pred_region
      _
    $region13: #{_linear_forward.1} parent=1 // pred_fallthru
      _
    // Predicated region
    $region14: #{_linear_forward.1} parent=1 // pred_check
      _
    $region15: #{_linear_forward.1} parent=1 // pred_check_branch
      %26 = sbr.rel (0) target = $region17
    $region16: #{_linear_forward.1} parent=1 // pred_region
      %27 = dma.done [#allocation4], 1024
    $region17: #{_linear_forward.1} parent=1 // pred_fallthru
      _
    %p29 = scmp.eq.s32.totalorder 0, 0
    // Predicated region
    $region18: #{_linear_forward.1} parent=1 // pred_check
      %p30 = pneg %p29
    $region19: #{_linear_forward.1} parent=1 // pred_check_branch
      %32 = sbr.rel (%p30) target = $region21
    $region20: #{_linear_forward.1} parent=1 // pred_region
      %v33 = vld [vmem:[%s2] sm:$0x1]
      %v35 = vlaneseq
      %v36 = vshrl.u32 %v35, 7
      %v37 = vsub.s32 0, %v36
      %v38 = vrot.slane %v33, %v37
      %v40 = vadd.f32 %v38, 0.0
      %41 = vst [vmem:[#allocation2] sm:$0xff] %v40
      %42 = vst [vmem:[#allocation2 + $0x8] sm:$0xff] %v40
    $region21: #{_linear_forward.1} parent=1 // pred_fallthru
      _
    %v43 = vld [vmem:[#allocation2] sm:$0xff]
    %v44 = vld [vmem:[#allocation2 + $0x8] sm:$0xff]
    %v45 = vld [vmem:[%s0] sm:$0xf]
    %v46 = vld [vmem:[%s0 + $0x4] sm:$0xf]
    %v47 = vld [vmem:[#allocation3] sm:$0xf]
    %v48 = vld [vmem:[#allocation3 + $0x4] sm:$0xf]
    %v49 = vld [vmem:[#allocation3 + $0x8] sm:$0xf]
    %v50 = vld [vmem:[#allocation3 + $0xc] sm:$0xf]
    %v51 = vld [vmem:[#allocation3 + $0x10] sm:$0xf]
    %v52 = vld [vmem:[#allocation3 + $0x14] sm:$0xf]
    %v53 = vld [vmem:[#allocation3 + $0x18] sm:$0xf]
    %v54 = vld [vmem:[#allocation3 + $0x1c] sm:$0xf]
    %v55 = vld [vmem:[#allocation3 + $0x20] sm:$0xf]
    %v56 = vld [vmem:[#allocation3 + $0x24] sm:$0xf]
    %v57 = vld [vmem:[#allocation3 + $0x28] sm:$0xf]
    %v58 = vld [vmem:[#allocation3 + $0x2c] sm:$0xf]
    %v59 = vld [vmem:[#allocation3 + $0x30] sm:$0xf]
    %v60 = vld [vmem:[#allocation3 + $0x34] sm:$0xf]
    %v61 = vld [vmem:[#allocation3 + $0x38] sm:$0xf]
    %v62 = vld [vmem:[#allocation3 + $0x3c] sm:$0xf]
    %v65 = vunpack.c.l.b16 %v45
    %v66 = vunpack.c.l.b16 %v46
    %v67 = vpack.c.b16 %v66, %v65
    %v85 = vunpack.c.l.b16 %v47
    %v86 = vunpack.c.l.b16 %v48
    %v87 = vunpack.c.l.b16 %v49
    %v88 = vunpack.c.l.b16 %v50
    %v89 = vunpack.c.l.b16 %v51
    %v90 = vunpack.c.l.b16 %v52
    %v91 = vunpack.c.l.b16 %v53
    %v92 = vunpack.c.l.b16 %v54
    %v93 = vunpack.c.l.b16 %v55
    %v94 = vunpack.c.l.b16 %v56
    %v95 = vunpack.c.l.b16 %v57
    %v96 = vunpack.c.l.b16 %v58
    %v97 = vunpack.c.l.b16 %v59
    %v98 = vunpack.c.l.b16 %v60
    %v99 = vunpack.c.l.b16 %v61
    %v100 = vunpack.c.l.b16 %v62
    %v101 = vpack.c.b16 %v86, %v85
    %v102 = vpack.c.b16 %v88, %v87
    %v103 = vpack.c.b16 %v90, %v89
    %v104 = vpack.c.b16 %v92, %v91
    %v105 = vpack.c.b16 %v94, %v93
    %v106 = vpack.c.b16 %v96, %v95
    %v107 = vpack.c.b16 %v98, %v97
    %v108 = vpack.c.b16 %v100, %v99
    %117 = vmatprep.subr.bf16.mxu0 0
    %118 = vmatpush1.bf16.msra.mxu0 %v101
    %119 = vmatprep.subr.bf16.mxu0 0
    %120 = vmatpush1.bf16.msra.mxu0 %v102
    %121 = vmatprep.subr.bf16.mxu0 0
    %122 = vmatpush1.bf16.msra.mxu0 %v103
    %123 = vmatprep.subr.bf16.mxu0 0
    %124 = vmatpush1.bf16.msra.mxu0 %v104
    %125 = vmatprep.subr.bf16.mxu0 0
    %126 = vmatpush1.bf16.msra.mxu0 %v105
    %127 = vmatprep.subr.bf16.mxu0 0
    %128 = vmatpush1.bf16.msra.mxu0 %v106
    %129 = vmatprep.subr.bf16.mxu0 0
    %130 = vmatpush1.bf16.msra.mxu0 %v107
    %131 = vmatprep.subr.bf16.mxu0 0
    %132 = vmatpush1.bf16.msra.mxu0 %v108
    %133 = vmatprep.subr.bf16.mxu0 0
    %134 = vmatpush1.bf16.msra.mxu0 0
    %135 = vmatprep.subr.bf16.mxu0 0
    %136 = vmatpush1.bf16.msra.mxu0 0
    %137 = vmatprep.subr.bf16.mxu0 0
    %138 = vmatpush1.bf16.msra.mxu0 0
    %139 = vmatprep.subr.bf16.mxu0 0
    %140 = vmatpush1.bf16.msra.mxu0 0
    %141 = vmatprep.subr.bf16.mxu0 0
    %142 = vmatpush1.bf16.msra.mxu0 0
    %143 = vmatprep.subr.bf16.mxu0 0
    %144 = vmatpush1.bf16.msra.mxu0 0
    %145 = vmatprep.subr.bf16.mxu0 0
    %146 = vmatpush1.bf16.msra.mxu0 0
    %147 = vmatprep.subr.bf16.mxu0 0
    %148 = vmatpush1.bf16.msra.mxu0 0
    %149 = vmatprep.mubr.bf16.mxu0 0
    %150 = vmatmul.mubr.bf16.gmra.mrb[0].mxu0 %v67
    %v151 = vpop.f32.mrb[0].mxu0
    %v152 = vadd.f32 0.0, %v151
    %v153 = vpop.f32.mrb[0].mxu0
    %v154 = vpop.f32.mrb[0].mxu0
    %v155 = vadd.f32 0.0, %v154
    %v156 = vpop.f32.mrb[0].mxu0
    %157 = vdwg.mxu0
    %v158 = vadd.f32 %v43, %v152
    %v159 = vadd.f32 %v44, %v155
    %160 = vst [vmem:[#allocation2] sm:$0xff] %v158
    %161 = vst [vmem:[#allocation2 + $0x8] sm:$0xff] %v159
    // Predicated region
    $region22: #{_linear_forward.1} parent=1 // pred_check
      %p162 = pneg %p29
    $region23: #{_linear_forward.1} parent=1 // pred_check_branch
      %164 = sbr.rel (%p162) target = $region25
    $region24: #{_linear_forward.1} parent=1 // pred_region
      %v165 = vld [vmem:[#allocation2] sm:$0xff]
      %v166 = vld [vmem:[#allocation2 + $0x8] sm:$0xff]
      %167 = vst [vmem:[%s3] sm:$0xff] %v165
      %168 = vst [vmem:[%s3 + $0x8] sm:$0xff] %v166
    $region25: #{_linear_forward.1} parent=1 // pred_fallthru
      _
    // Predicated region
    $region26: #{_linear_forward.1} parent=1 // pred_check
      _
    $region27: #{_linear_forward.1} parent=1 // pred_check_branch
      %170 = sbr.rel (0) target = $region29
    $region28: #{_linear_forward.1} parent=1 // pred_region
      _
    $region29: #{_linear_forward.1} parent=1 // pred_fallthru
      _
    // Predicated region
    $region30: #{_linear_forward.1} parent=1 // pred_check
      _
    $region31: #{_linear_forward.1} parent=1 // pred_check_branch
      %172 = sbr.rel (0) target = $region33
    $region32: #{_linear_forward.1} parent=1 // pred_region
      _
    $region33: #{_linear_forward.1} parent=1 // pred_fallthru
      _
    %173 = vsyncpa [#allocation4], 1

</llo_original>
